<compile_context>
chip_gen: v7x
topology: tpu7x:2x2x1
jax: 0.10.0
libtpu: 0.0.40
codegen_flags: <defaults>
</compile_context>

<pallas_src>
from functools import partial

import jax
import jax.numpy as jnp
from jax.experimental import pallas as pl
from jax.experimental.pallas import tpu as pltpu

_EPS = 1e-5  # nn.BatchNorm1d default


# --------------------------------------------------------------------------
# Generation-aware sizing helpers
# --------------------------------------------------------------------------
def _vmem_budget():
    """(vmem_limit_bytes, tile_budget_bytes) derived from the chip's VMEM."""
    physical = 64 * 1024 * 1024  # conservative default (v7x per-TC VMEM)
    try:
        info = pltpu.get_tpu_info()
        cap = getattr(info, "vmem_capacity_bytes", None)
        if cap:
            physical = int(cap)
    except Exception:
        pass
    limit = int(physical * 0.75)        # explicit scoped-VMEM limit
    tile_budget = int(physical * 0.55)  # what the tiling heuristic may plan for
    return limit, tile_budget


def _detect_num_cores():
    """Best-effort TensorCore-per-chip count (2 on v7x, 1 on v5e/v6e)."""
    try:
        info = pltpu.get_tpu_info()
        for attr in ("num_cores", "tensorcore_count", "num_tensorcores",
                     "cores_per_chip", "core_count"):
            v = getattr(info, attr, None)
            if isinstance(v, int) and v > 0:
                return v
    except Exception:
        pass
    return 1


def _pick_hidden_tile(N, F, H_core, O_pad, elem_bytes, budget_bytes):
    """Largest hidden tile (divisor of H_core, multiple of 128) under budget,
    preferring >= 2 grid steps per core so the weight DMA pipelines."""
    if H_core % 128 != 0:
        return H_core  # full-extent block is always layout-legal (tiny models)
    cands = [d for d in range(128, H_core + 1, 128) if H_core % d == 0]
    # Resident buffers (x, gamma/beta slab, f32 output partial), 2x for
    # double-buffering headroom.
    resident = 2 * (N * F * elem_bytes + 2 * H_core * 4 + N * O_pad * 4)

    def fits(th):
        per_step = 2 * (F * th + th * O_pad) * elem_bytes  # 2-deep pipeline
        return resident + per_step <= budget_bytes

    # Prefer tiles giving at least 2 steps (exposed-DMA single-step avoided).
    for th in sorted(cands, reverse=True):
        if H_core // th >= 2 and fits(th):
            return th
    for th in sorted(cands, reverse=True):
        if fits(th):
            return th
    return cands[0]


# --------------------------------------------------------------------------
# Kernel
# --------------------------------------------------------------------------
def _mlp_kernel(nsteps, th, x_ref, w1_ref, gb_ref, w2_ref, o_ref):
    k = pl.program_id(1)  # hidden-block step within this core's half

    # Per-core f32 output partial is resident across the (reduction) hidden
    # axis and acts as the accumulator directly.
    @pl.when(k == 0)
    def _():
        o_ref[...] = jnp.zeros_like(o_ref)

    # First linear (no bias): bf16 operands, f32 accumulation on the MXU.
    h = jnp.dot(x_ref[...], w1_ref[...], preferred_element_type=jnp.float32)

    # BatchNorm1d, training-mode batch statistics (per hidden feature), f32.
    mean = jnp.mean(h, axis=0, keepdims=True)                   # (1, th)
    centered = h - mean
    var = jnp.mean(centered * centered, axis=0, keepdims=True)  # biased (PyTorch fwd)

    # gamma/beta slab is resident for the whole core; slice this step's tile.
    if nsteps == 1:
        gamma = gb_ref[0:1, :]
        beta = gb_ref[1:2, :]
    else:
        start = pl.multiple_of(k * th, 128)
        gamma = gb_ref[0:1, pl.ds(start, th)]
        beta = gb_ref[1:2, pl.ds(start, th)]

    hn = centered * jax.lax.rsqrt(var + _EPS) * gamma + beta

    # ReLU, back to the streaming dtype for the second MXU matmul.
    hr = jnp.maximum(hn, 0.0).astype(w2_ref.dtype)

    # Second linear (no bias), accumulated over hidden blocks into o_ref.
    o_ref[0] += jnp.dot(hr, w2_ref[...], preferred_element_type=jnp.float32)


# --------------------------------------------------------------------------
# Wrappers
# --------------------------------------------------------------------------
def prepare_params(w1, gamma, beta, w2, *, compute_dtype=jnp.bfloat16):
    """One-time parameter preprocessing (hoisted out of the per-call path).

    w1: (F, H), w2: (H, O) stored as (in, out) — transpose of nn.Linear.weight.
    Returns dict with bf16 weights, lane-padded W2 and the stacked (2, H)
    gamma/beta slab.
    """
    O = w2.shape[1]
    O_pad = max(128, ((O + 127) // 128) * 128)  # lane-dense output
    w2p = jnp.pad(w2, ((0, 0), (0, O_pad - O))) if O_pad != O else w2
    gb = jnp.stack([gamma.reshape(-1), beta.reshape(-1)], axis=0).astype(jnp.float32)
    return {
        "w1": w1.astype(compute_dtype),
        "gb": gb,
        "w2": w2p.astype(compute_dtype),
        "out_features": O,
    }


def mlp_forward(x, params, *, num_cores=None, th=None):
    """Fused MLP forward. x: (N, F) f32. Returns (N, out_features) f32."""
    w1, gb, w2 = params["w1"], params["gb"], params["w2"]
    O = params["out_features"]
    compute_dtype = w1.dtype
    elem_bytes = jnp.dtype(compute_dtype).itemsize

    N, F = x.shape
    H = w1.shape[1]
    O_pad = w2.shape[1]

    # Hidden-dim split across TensorCores (v7x has 2; sequential elsewhere).
    if num_cores is None:
        num_cores = _detect_num_cores()
    if (num_cores < 1 or H % num_cores != 0
            or (num_cores > 1 and (H // num_cores) % 128 != 0)):
        num_cores = 1
    H_core = H // num_cores

    vmem_limit, tile_budget = _vmem_budget()
    if th is None:
        th = _pick_hidden_tile(N, F, H_core, O_pad, elem_bytes, tile_budget)
    assert H_core % th == 0, "hidden dim per core must be divisible by the tile"
    assert th % 128 == 0 or th == H_core, "hidden tile must be 128-aligned"
    nsteps = H_core // th

    xc = x.astype(compute_dtype)

    flops = 2 * N * F * H + 2 * N * H * O_pad + 8 * N * H
    bytes_accessed = (xc.size * elem_bytes + w1.size * elem_bytes
                      + w2.size * elem_bytes + gb.size * 4
                      + num_cores * N * O_pad * 4)
    cost = pl.CostEstimate(flops=int(flops), transcendentals=int(H),
                           bytes_accessed=int(bytes_accessed))

    partials = pl.pallas_call(
        partial(_mlp_kernel, nsteps, th),
        out_shape=jax.ShapeDtypeStruct((num_cores, N, O_pad), jnp.float32),
        grid=(num_cores, nsteps),
        in_specs=[
            pl.BlockSpec((N, F), lambda c, k: (0, 0)),               # x: resident
            pl.BlockSpec((F, th), lambda c, k: (0, c * nsteps + k)),  # W1 stream
            pl.BlockSpec((2, H_core), lambda c, k: (0, c)),           # gamma/beta resident
            pl.BlockSpec((th, O_pad), lambda c, k: (c * nsteps + k, 0)),  # W2 stream
        ],
        out_specs=pl.BlockSpec((1, N, O_pad), lambda c, k: (c, 0, 0)),  # per-core partial
        compiler_params=pltpu.CompilerParams(
            dimension_semantics=("parallel", "arbitrary"),
            vmem_limit_bytes=vmem_limit,
        ),
        cost_estimate=cost,
    )(xc, w1, gb, w2)

    out = partials.sum(axis=0)  # combine per-core partials (no-op cost at num_cores=1)
    return out[:, :O] if O_pad != O else out


def mlp_reference(x, w1, gamma, beta, w2, *, compute_dtype=jnp.float32):
    """Pure-JAX reference with the same dtype policy as the kernel."""
    xc = x.astype(compute_dtype)
    w1c = w1.astype(compute_dtype)
    w2c = w2.astype(compute_dtype)
    h = jnp.dot(xc, w1c, preferred_element_type=jnp.float32)
    mean = jnp.mean(h, axis=0, keepdims=True)
    var = jnp.mean((h - mean) ** 2, axis=0, keepdims=True)  # biased, as PyTorch BN fwd
    hn = (h - mean) * jax.lax.rsqrt(var + _EPS) * gamma.reshape(1, -1) + beta.reshape(1, -1)
    hr = jnp.maximum(hn, 0.0).astype(compute_dtype)
    return jnp.dot(hr, w2c, preferred_element_type=jnp.float32)


if __name__ == "__main__":
    # Scaled-down shapes consistent with MLP(in=2048, hidden=4096, out=256).
    N, F, H, O = 8, 256, 512, 128

    key = jax.random.PRNGKey(0)
    kx, k1, k2, kg, kb = jax.random.split(key, 5)

    x = jax.random.normal(kx, (N, F), dtype=jnp.float32)
    # Deterministic synthetic parameters (module __init__ only defines shapes).
    w1 = jax.random.normal(k1, (F, H), dtype=jnp.float32) * (1.0 / F ** 0.5)
    w2 = jax.random.normal(k2, (H, O), dtype=jnp.float32) * (1.0 / H ** 0.5)
    gamma = 1.0 + 0.1 * jax.random.normal(kg, (1, H), dtype=jnp.float32)
    beta = 0.1 * jax.random.normal(kb, (1, H), dtype=jnp.float32)

    # One-time parameter preprocessing (hoisted out of the forward path).
    params = prepare_params(w1, gamma, beta, w2)

    # Default path: auto core-count / tile selection (>= 2 pipelined hidden
    # steps per core), bf16 weight streaming, f32 MXU accumulation + BN.
    out = jax.block_until_ready(mlp_forward(x, params))
    assert out.shape == (N, O)

    # Matched-precision reference (same bf16 matmul inputs, f32 accumulate/BN).
    ref_bf16 = mlp_reference(x, w1, gamma, beta, w2, compute_dtype=jnp.bfloat16)
    assert jnp.allclose(out, ref_bf16, atol=1e-2, rtol=1e-2), "mismatch vs bf16 reference"

    # Sanity check against the pure-f32 reference (looser: bf16 streaming).
    ref_f32 = mlp_reference(x, w1, gamma, beta, w2, compute_dtype=jnp.float32)
    assert jnp.allclose(out, ref_f32, atol=5e-2, rtol=5e-2), "mismatch vs f32 reference"

    # Explicit 2-core hidden split (v7x path; correct-but-sequential elsewhere).
    out_2c = jax.block_until_ready(mlp_forward(x, params, num_cores=2))
    assert jnp.allclose(out_2c, ref_bf16, atol=1e-2, rtol=1e-2), "2-core mismatch"

    # Forced small tile -> deeper multi-step reduction into the resident partial.
    out_multi = jax.block_until_ready(mlp_forward(x, params, th=128))
    assert jnp.allclose(out_multi, ref_bf16, atol=1e-2, rtol=1e-2), "multi-step mismatch"

    # TODO(synk): BatchNorm1d running_mean/running_var buffer updates (a
    # training-mode side effect of the PyTorch module) are not emitted; only
    # the forward normalization with batch statistics is computed.
    print("KERNEL_OK")
</pallas_src>

<mosaic_0001>
module attributes {stable_mosaic.version = 11 : i64} {
  func.func @_mlp_kernel(%arg0: i32, %arg1: i32, %arg2: memref<8x256xbf16, #tpu.memory_space<vmem>>, %arg3: memref<256x256xbf16, #tpu.memory_space<vmem>>, %arg4: memref<2x512xf32, #tpu.memory_space<vmem>>, %arg5: memref<256x128xbf16, #tpu.memory_space<vmem>>, %arg6: memref<1x8x128xf32, #tpu.memory_space<vmem>>) attributes {dimension_semantics = [#tpu.dimension_semantics<parallel>, #tpu.dimension_semantics<arbitrary>], iteration_bounds = array<i64: 1, 2>, scalar_prefetch = 0 : i64, scratch_operands = 0 : i64, tpu.core_type = #tpu.core_type<tc>, window_params = [{pipeline_mode = #tpu.pipeline_mode<synchronous>, transform_indices = @transform_0, window_bounds = array<i64: 8, 256>}, {transform_indices = @transform_1, window_bounds = array<i64: 256, 256>}, {transform_indices = @transform_2, window_bounds = array<i64: 2, 512>}, {transform_indices = @transform_3, window_bounds = array<i64: 256, 128>}, {transform_indices = @transform_4, window_bounds = array<i64: 1, 8, 128>}]} {
    %c0_i32 = arith.constant 0 : i32
    %0 = arith.cmpi eq, %arg1, %c0_i32 : i32
    %1 = arith.extui %0 : i1 to i32
    %c0_i32_0 = arith.constant 0 : i32
    %2 = arith.cmpi ne, %1, %c0_i32_0 : i32
    scf.if %2 {
      %cst_20 = arith.constant 0.000000e+00 : f32
      %43 = vector.broadcast %cst_20 : f32 to vector<1x8x128xf32>
      %c0_21 = arith.constant 0 : index
      %c0_22 = arith.constant 0 : index
      %c0_23 = arith.constant 0 : index
      %44 = vector.load %arg6[%c0_21, %c0_22, %c0_23] : memref<1x8x128xf32, #tpu.memory_space<vmem>>, vector<1x8x128xf32>
      tpu.vector_store %arg6[%c0_21, %c0_22, %c0_23], %43 {strides = array<i32>} : memref<1x8x128xf32, #tpu.memory_space<vmem>>, vector<1x8x128xf32>,
    } else {
    }
    %c0 = arith.constant 0 : index
    %c0_1 = arith.constant 0 : index
    %3 = vector.load %arg2[%c0, %c0_1] : memref<8x256xbf16, #tpu.memory_space<vmem>>, vector<8x256xbf16>
    %c0_2 = arith.constant 0 : index
    %c0_3 = arith.constant 0 : index
    %4 = vector.load %arg3[%c0_2, %c0_3] : memref<256x256xbf16, #tpu.memory_space<vmem>>, vector<256x256xbf16>
    %cst = arith.constant dense<0.000000e+00> : vector<8x256xf32>
    %5 = tpu.matmul %3, %4, %cst {dimension_numbers = #tpu.dot_dimension_numbers<[1], [0], [0], [1], [0, 0, 1, 1], [], []>} : vector<8x256xbf16>, vector<256x256xbf16>, vector<8x256xf32> -> vector<8x256xf32>
    %cst_4 = arith.constant dense<0.000000e+00> : vector<256xf32>
    %6 = vector.multi_reduction <add>, %5, %cst_4 [0] : vector<8x256xf32> to vector<256xf32>
    %7 = vector.shape_cast %6 : vector<256xf32> to vector<1x256xf32>
    %cst_5 = arith.constant 8.000000e+00 : f32
    %8 = vector.broadcast %cst_5 : f32 to vector<1x256xf32>
    %9 = arith.divf %7, %8 : vector<1x256xf32>
    %10 = vector.broadcast %9 : vector<1x256xf32> to vector<8x256xf32>
    %11 = arith.subf %5, %10 : vector<8x256xf32>
    %12 = arith.mulf %11, %11 : vector<8x256xf32>
    %cst_6 = arith.constant dense<0.000000e+00> : vector<256xf32>
    %13 = vector.multi_reduction <add>, %12, %cst_6 [0] : vector<8x256xf32> to vector<256xf32>
    %14 = vector.shape_cast %13 : vector<256xf32> to vector<1x256xf32>
    %cst_7 = arith.constant 8.000000e+00 : f32
    %15 = vector.broadcast %cst_7 : f32 to vector<1x256xf32>
    %16 = arith.divf %14, %15 : vector<1x256xf32>
    %c256_i32 = arith.constant 256 : i32
    %17 = arith.muli %arg1, %c256_i32 : i32
    %18 = tpu.assume_multiple %17, 128 : i32
    %c0_8 = arith.constant 0 : index
    %19 = arith.index_cast %18 : i32 to index
    %20 = vector.load %arg4[%c0_8, %19] : memref<2x512xf32, #tpu.memory_space<vmem>>, vector<1x256xf32>
    %c1 = arith.constant 1 : index
    %21 = arith.index_cast %18 : i32 to index
    %22 = vector.load %arg4[%c1, %21] : memref<2x512xf32, #tpu.memory_space<vmem>>, vector<1x256xf32>
    %cst_9 = arith.constant 9.99999974E-6 : f32
    %23 = vector.broadcast %cst_9 : f32 to vector<1x256xf32>
    %24 = arith.addf %16, %23 : vector<1x256xf32>
    %25 = math.rsqrt %24 : vector<1x256xf32>
    %26 = vector.broadcast %25 : vector<1x256xf32> to vector<8x256xf32>
    %27 = arith.mulf %11, %26 : vector<8x256xf32>
    %28 = vector.broadcast %20 : vector<1x256xf32> to vector<8x256xf32>
    %29 = arith.mulf %27, %28 : vector<8x256xf32>
    %30 = vector.broadcast %22 : vector<1x256xf32> to vector<8x256xf32>
    %31 = arith.addf %29, %30 : vector<8x256xf32>
    %cst_10 = arith.constant 0.000000e+00 : f32
    %32 = vector.broadcast %cst_10 : f32 to vector<8x256xf32>
    %33 = arith.maximumf %31, %32 : vector<8x256xf32>
    %34 = arith.truncf %33 : vector<8x256xf32> to vector<8x256xbf16>
    %c0_11 = arith.constant 0 : index
    %c0_12 = arith.constant 0 : index
    %c0_13 = arith.constant 0 : index
    %35 = vector.load %arg6[%c0_11, %c0_12, %c0_13] : memref<1x8x128xf32, #tpu.memory_space<vmem>>, vector<1x8x128xf32>
    %36 = vector.shape_cast %35 : vector<1x8x128xf32> to vector<8x128xf32>
    %c0_14 = arith.constant 0 : index
    %c0_15 = arith.constant 0 : index
    %37 = vector.load %arg5[%c0_14, %c0_15] : memref<256x128xbf16, #tpu.memory_space<vmem>>, vector<256x128xbf16>
    %cst_16 = arith.constant dense<0.000000e+00> : vector<8x128xf32>
    %38 = tpu.matmul %34, %37, %cst_16 {dimension_numbers = #tpu.dot_dimension_numbers<[1], [0], [0], [1], [0, 0, 1, 1], [], []>} : vector<8x256xbf16>, vector<256x128xbf16>, vector<8x128xf32> -> vector<8x128xf32>
    %39 = arith.addf %36, %38 : vector<8x128xf32>
    %c0_17 = arith.constant 0 : index
    %c0_18 = arith.constant 0 : index
    %c0_19 = arith.constant 0 : index
    %40 = vector.load %arg6[%c0_17, %c0_18, %c0_19] : memref<1x8x128xf32, #tpu.memory_space<vmem>>, vector<1x8x128xf32>
    %41 = vector.shape_cast %40 : vector<1x8x128xf32> to vector<8x128xf32>
    %42 = vector.shape_cast %39 : vector<8x128xf32> to vector<1x8x128xf32>
    tpu.vector_store %arg6[%c0_17, %c0_18, %c0_19], %42 {strides = array<i32>} : memref<1x8x128xf32, #tpu.memory_space<vmem>>, vector<1x8x128xf32>,
    return
  }
  func.func @transform_0(%arg0: i32, %arg1: i32) -> (i32, i32) {
    %c0_i32 = arith.constant 0 : i32
    %c0_i32_0 = arith.constant 0 : i32
    %c0_i32_1 = arith.constant 0 : i32
    return %c0_i32, %c0_i32_0 : i32, i32
  }
  func.func @transform_1(%arg0: i32, %arg1: i32) -> (i32, i32) {
    %c2_i32 = arith.constant 2 : i32
    %0 = arith.muli %arg0, %c2_i32 : i32
    %1 = arith.addi %0, %arg1 : i32
    %c0_i32 = arith.constant 0 : i32
    %c0_i32_0 = arith.constant 0 : i32
    return %c0_i32, %1 : i32, i32
  }
  func.func @transform_2(%arg0: i32, %arg1: i32) -> (i32, i32) {
    %c0_i32 = arith.constant 0 : i32
    %c0_i32_0 = arith.constant 0 : i32
    return %c0_i32, %arg0 : i32, i32
  }
  func.func @transform_3(%arg0: i32, %arg1: i32) -> (i32, i32) {
    %c2_i32 = arith.constant 2 : i32
    %0 = arith.muli %arg0, %c2_i32 : i32
    %1 = arith.addi %0, %arg1 : i32
    %c0_i32 = arith.constant 0 : i32
    %c0_i32_0 = arith.constant 0 : i32
    return %1, %c0_i32 : i32, i32
  }
  func.func @transform_4(%arg0: i32, %arg1: i32) -> (i32, i32, i32) {
    %c0_i32 = arith.constant 0 : i32
    %c0_i32_0 = arith.constant 0 : i32
    %c0_i32_1 = arith.constant 0 : i32
    return %arg0, %c0_i32, %c0_i32_0 : i32, i32, i32
  }
}

</mosaic_0001>

<llo_original>
// kernel: tpu_custom_call.1
$region0: #{tpu_custom_call.1}
  #allocation0 [shape = 'u32[]', space=smem, size = 0x4, offset = 0x4, fixed_abs, tag = 'smem constant byte address 0x4 - core index']
  #allocation1 [shape = 'u32[144,128]{1,0:T(1,128)}', space=vmem, size = 0x12000, scoped, tag = 'internal scratch']
  %s0 = inlined_call_operand.hbm [shape: bf16[8,256], index: 0, kind: input, shape index: {}]
  %s1 = inlined_call_operand.hbm [shape: bf16[256,512], index: 1, kind: input, shape index: {}]
  %s2 = inlined_call_operand.hbm [shape: f32[2,512], index: 2, kind: input, shape index: {}]
  %s3 = inlined_call_operand.hbm [shape: bf16[512,128], index: 3, kind: input, shape index: {}]
  %s4 = inlined_call_operand.hbm [shape: f32[1,8,128], index: 4, kind: output, shape index: {}]
  %s5 = sld [smem:[#allocation0]]
  $region69: #{tpu_custom_call.1} parent=0
    _
  %s7 = ssub.s32 1, %s5
  %s8 = scalar_select 0, %s7, %s5
  $region1: #{tpu_custom_call.1} parent=0
    #allocation2 [shape = 'u8[4096]{0}', space=vmem, size = 0x1000, scoped, tag = 'input window, operand 0, single buffered']
    #allocation3 [shape = 's32[2]{0}', space=sflag, size = 0x8, scoped, tag = 'scoped memory for tpu_custom_call.1']
    #allocation4 [shape = 's32[2]{0}', space=sflag, size = 0x8, scoped, tag = 'scoped memory for tpu_custom_call.1']
    #allocation5 [shape = 'u8[262144]{0}', space=vmem, size = 0x40000, scoped, tag = 'input window, operand 1']
    #allocation6 [shape = 's32[2]{0}', space=sflag, size = 0x8, scoped, tag = 'scoped memory for tpu_custom_call.1']
    #allocation7 [shape = 'u8[4096]{0}', space=vmem, size = 0x1000, scoped, tag = 'input window, operand 2, single buffered']
    #allocation8 [shape = 'u8[131072]{0}', space=vmem, size = 0x20000, scoped, tag = 'input window, operand 3']
    #allocation9 [shape = 's32[2]{0}', space=sflag, size = 0x8, scoped, tag = 'scoped memory for tpu_custom_call.1']
    #allocation10 [shape = 'u8[4096]{0}', space=vmem, size = 0x1000, scoped, tag = 'output window, operand 0, single buffered']
    %9 = vsyncpa [#allocation3], 0
    %10 = vsyncpa [#allocation6], 0
    %s11 = scalar_lea.sflag [#allocation6], 1
    %12 = vsyncpa %s11, 0
    %13 = vsyncpa [#allocation9], 0
    %s14 = scalar_lea.sflag [#allocation9], 1
    %15 = vsyncpa %s14, 0
    %16 = vsyncpa [#allocation4], 0
    loop: start=0, step=1, limit=4
    $region2: #{tpu_custom_call.1} parent=1 // loop_pre_header
      _
    $region3: #{tpu_custom_call.1} parent=1 // loop_header
      %s18 = sphi 0, %s22
      %p19 = scmp.ge.s32.totalorder %s18, 4
      %s25 = sphi 0, %s37
      %s26 = sphi 0, %s33
      %s27 = sphi 0, %s25
      %s28 = sphi 0, %s26
      %s29 = sphi 0, %s27
      %s30 = sphi 0, %s28
      %s38 = sphi 0, %s38
      %s40 = sphi 0, %s38
      %s41 = sphi 0, %s40
      %s55 = sphi 0, %s41
      %s65 = sphi 0, %s67
      %s68 = sphi 0, %s65
      %s69 = sphi 0, %s68
      %s85 = sphi 0, %s69
      %s91 = sphi 0, %s93
      %s94 = sphi 0, %s91
      %s95 = sphi 0, %s94
      %s111 = sphi 0, %s95
      %s121 = sphi 0, %s123
      %s124 = sphi 0, %s121
      %s125 = sphi 0, %s124
      %s141 = sphi 0, %s125
      %s147 = sphi 0, %s149
      %s150 = sphi 0, %s147
      %s151 = sphi 0, %s150
      %s167 = sphi 0, %s151
    $region4: #{tpu_custom_call.1} parent=1 // loop_header_branch
      %21 = sbr.rel (%p19) target = $region8
    $region5: #{tpu_custom_call.1} parent=1 // loop_body
      %s23 = ssub.s32 %s18, 1
      %s24 = ssub.s32 %s18, 2
      %s31 = sadd.s32 1, %s26
      %p32 = scmp.ge.s32.totalorder %s31, 2
      %s33 = scalar_select %p32, 0, %s31
      %s34 = sadd.s32 1, %s25
      %s35 = scalar_select %p32, %s34, %s25
      %p36 = scmp.ge.s32.totalorder %s35, 1
      %s37 = scalar_select %p36, 0, %s35
      %s39 = sadd.s32 %s38, 1
      %p42 = scmp.eq.s32.totalorder %s18, 1
      %p43 = scmp.ne.s32.totalorder %s38, %s40
      %p44 = scmp.eq.s32.totalorder %s18, 0
      %p45 = por %p43, %p44
      %p46 = scmp.ne.s32.totalorder %s38, %s40
      %p47 = scmp.eq.s32.totalorder %s23, 1
      %p48 = por %p46, %p47
      %p49 = scmp.ne.s32.totalorder %s40, %s41
      %p50 = scmp.eq.s32.totalorder %s23, 0
      %p51 = por %p49, %p50
      %p52 = scmp.ne.s32.totalorder %s40, %s41
      %p53 = scmp.eq.s32.totalorder %s24, 1
      %p54 = por %p52, %p53
      %p56 = scmp.ne.s32.totalorder %s41, %s55
      %p57 = scmp.eq.s32.totalorder %s24, 0
      %p58 = por %p56, %p57
      %s59 = smul.u32 %s25, 2
      %s60 = sadd.s32 %s59, %s26
      %s61 = smul.u32 %s37, 2
      %s62 = sadd.s32 %s61, %s33
      %s63 = ssub.s32 %s60, %s62
      %p64 = scmp.eq.s32.totalorder %s63, 0
      %s66 = sadd.s32 %s65, 1
      %s67 = scalar_select %p64, %s65, %s66
      %p70 = pneg %p64
      %p71 = scmp.eq.s32.totalorder %s18, 1
      %p72 = por %p70, %p71
      %p73 = scmp.ne.s32.totalorder %s65, %s68
      %p74 = scmp.eq.s32.totalorder %s18, 0
      %p75 = por %p73, %p74
      %p76 = scmp.ne.s32.totalorder %s65, %s68
      %p77 = scmp.eq.s32.totalorder %s23, 1
      %p78 = por %p76, %p77
      %p79 = scmp.ne.s32.totalorder %s68, %s69
      %p80 = scmp.eq.s32.totalorder %s23, 0
      %p81 = por %p79, %p80
      %p82 = scmp.ne.s32.totalorder %s68, %s69
      %p83 = scmp.eq.s32.totalorder %s24, 1
      %p84 = por %p82, %p83
      %p86 = scmp.ne.s32.totalorder %s69, %s85
      %p87 = scmp.eq.s32.totalorder %s24, 0
      %p88 = por %p86, %p87
      %s89 = ssub.s32 %s25, %s37
      %p90 = scmp.eq.s32.totalorder %s89, 0
      %s92 = sadd.s32 %s91, 1
      %s93 = scalar_select %p90, %s91, %s92
      %p96 = pneg %p90
      %p97 = scmp.eq.s32.totalorder %s18, 1
      %p98 = por %p96, %p97
      %p99 = scmp.ne.s32.totalorder %s91, %s94
      %p100 = scmp.eq.s32.totalorder %s18, 0
      %p101 = por %p99, %p100
      %p102 = scmp.ne.s32.totalorder %s91, %s94
      %p103 = scmp.eq.s32.totalorder %s23, 1
      %p104 = por %p102, %p103
      %p105 = scmp.ne.s32.totalorder %s94, %s95
      %p106 = scmp.eq.s32.totalorder %s23, 0
      %p107 = por %p105, %p106
      %p108 = scmp.ne.s32.totalorder %s94, %s95
      %p109 = scmp.eq.s32.totalorder %s24, 1
      %p110 = por %p108, %p109
      %p112 = scmp.ne.s32.totalorder %s95, %s111
      %p113 = scmp.eq.s32.totalorder %s24, 0
      %p114 = por %p112, %p113
      %s115 = smul.u32 %s25, 2
      %s116 = sadd.s32 %s115, %s26
      %s117 = smul.u32 %s37, 2
      %s118 = sadd.s32 %s117, %s33
      %s119 = ssub.s32 %s116, %s118
      %p120 = scmp.eq.s32.totalorder %s119, 0
      %s122 = sadd.s32 %s121, 1
      %s123 = scalar_select %p120, %s121, %s122
      %p126 = pneg %p120
      %p127 = scmp.eq.s32.totalorder %s18, 1
      %p128 = por %p126, %p127
      %p129 = scmp.ne.s32.totalorder %s121, %s124
      %p130 = scmp.eq.s32.totalorder %s18, 0
      %p131 = por %p129, %p130
      %p132 = scmp.ne.s32.totalorder %s121, %s124
      %p133 = scmp.eq.s32.totalorder %s23, 1
      %p134 = por %p132, %p133
      %p135 = scmp.ne.s32.totalorder %s124, %s125
      %p136 = scmp.eq.s32.totalorder %s23, 0
      %p137 = por %p135, %p136
      %p138 = scmp.ne.s32.totalorder %s124, %s125
      %p139 = scmp.eq.s32.totalorder %s24, 1
      %p140 = por %p138, %p139
      %p142 = scmp.ne.s32.totalorder %s125, %s141
      %p143 = scmp.eq.s32.totalorder %s24, 0
      %p144 = por %p142, %p143
      %s145 = ssub.s32 %s25, %s37
      %p146 = scmp.eq.s32.totalorder %s145, 0
      %s148 = sadd.s32 %s147, 1
      %s149 = scalar_select %p146, %s147, %s148
      %p152 = pneg %p146
      %p153 = scmp.eq.s32.totalorder %s18, 1
      %p154 = por %p152, %p153
      %p155 = scmp.ne.s32.totalorder %s147, %s150
      %p156 = scmp.eq.s32.totalorder %s18, 0
      %p157 = por %p155, %p156
      %p158 = scmp.ne.s32.totalorder %s147, %s150
      %p159 = scmp.eq.s32.totalorder %s23, 1
      %p160 = por %p158, %p159
      %p161 = scmp.ne.s32.totalorder %s150, %s151
      %p162 = scmp.eq.s32.totalorder %s23, 0
      %p163 = por %p161, %p162
      %p164 = scmp.ne.s32.totalorder %s150, %s151
      %p165 = scmp.eq.s32.totalorder %s24, 1
      %p166 = por %p164, %p165
      %p168 = scmp.ne.s32.totalorder %s151, %s167
      %p169 = scmp.eq.s32.totalorder %s24, 0
      %p170 = por %p168, %p169
      %p171 = scmp.le.s32.totalorder 1, %s18
      %p172 = scmp.lt.s32.totalorder %s18, 3
      %p173 = pnand %p171, %p172
      %p174 = pneg %p173
      // Predicated region
      $region9: #{tpu_custom_call.1} parent=5 // pred_check
        _
      $region10: #{tpu_custom_call.1} parent=5 // pred_check_branch
        %176 = sbr.rel (%p173) target = $region12
      $region11: #{tpu_custom_call.1} parent=5 // pred_region
        %s177 = ssub.s32 %s18, 1
        // Predicated region
        $region13: #{tpu_custom_call.1} parent=11 // pred_check
          %p178 = pneg %p51
        $region14: #{tpu_custom_call.1} parent=11 // pred_check_branch
          %180 = sbr.rel (%p178) target = $region16
        $region15: #{tpu_custom_call.1} parent=11 // pred_region
          %s182 = ssub.s32 128, 128
          %183 = vsyncadd [#allocation3], %s182
          %s185 = sshll.u32 [#allocation2], 4
          %s186 = int_to_ptr.vmem [resolvable:$true] %s185
          %188 = dma.hbm_to_vmem [thread:$0]  %s0, 128, %s186, [#allocation3]
        $region16: #{tpu_custom_call.1} parent=11 // pred_fallthru
          _
        // Predicated region
        $region17: #{tpu_custom_call.1} parent=11 // pred_check
          %p189 = pneg %p107
        $region18: #{tpu_custom_call.1} parent=11 // pred_check_branch
          %191 = sbr.rel (%p189) target = $region20
        $region19: #{tpu_custom_call.1} parent=11 // pred_region
          %s192 = smul.u32 4, %s27
          %s194 = ssub.s32 128, 128
          %195 = vsyncadd [#allocation6], %s194
          %s196 = smul.addr %s192, 32
          %s197 = scalar_lea.hbm %s2, %s196
          %s199 = sshll.u32 [#allocation7], 4
          %s200 = int_to_ptr.vmem [resolvable:$true] %s199
          %202 = dma.hbm_to_vmem [thread:$0]  %s197, 128, %s200, [#allocation6]
        $region20: #{tpu_custom_call.1} parent=11 // pred_fallthru
          _
      $region12: #{tpu_custom_call.1} parent=5 // pred_fallthru
        _
      %p203 = scmp.lt.s32.totalorder %s18, 2
      // Predicated region
      $region21: #{tpu_custom_call.1} parent=5 // pred_check
        %p204 = pneg %p203
      $region22: #{tpu_custom_call.1} parent=5 // pred_check_branch
        %206 = sbr.rel (%p204) target = $region24
      $region23: #{tpu_custom_call.1} parent=5 // pred_region
        // Predicated region
        $region25: #{tpu_custom_call.1} parent=23 // pred_check
          %p207 = pneg %p75
        $region26: #{tpu_custom_call.1} parent=23 // pred_check_branch
          %209 = sbr.rel (%p207) target = $region28
        $region27: #{tpu_custom_call.1} parent=23 // pred_region
          %s210 = sand.u32 %s18, 1
          %s211 = scalar_lea.sflag [#allocation6], %s210
          %s212 = sand.u32 %s65, 1
          %s213 = smul.addr %s212, 256
          %s214 = scalar_lea.vmem [#allocation5], %s213
          %s215 = smul.u32 %s25, 2
          %s216 = sadd.s32 %s215, %s26
          %s217 = smul.u32 2, %s216
          %s219 = ssub.s32 4096, 4096
          %220 = vsyncadd %s211, %s219
          %s221 = smul.addr %s217, 64
          %s222 = scalar_lea.hbm %s1, %s221
          %s223 = sshll.u32 %s214, 4
          %s224 = int_to_ptr.vmem [resolvable:$true] %s223
          %229 = dma.hbm_to_vmem [thread:$0]  %s222, 4096, %s224, %s211, 256, 128, 8
        $region28: #{tpu_custom_call.1} parent=23 // pred_fallthru
          _
        // Predicated region
        $region29: #{tpu_custom_call.1} parent=23 // pred_check
          %p230 = pneg %p131
        $region30: #{tpu_custom_call.1} parent=23 // pred_check_branch
          %232 = sbr.rel (%p230) target = $region32
        $region31: #{tpu_custom_call.1} parent=23 // pred_region
          %s233 = sand.u32 %s121, 1
          %s234 = scalar_lea.sflag [#allocation9], %s233
          %s235 = sand.u32 %s121, 1
          %s236 = smul.addr %s235, 128
          %s237 = scalar_lea.vmem [#allocation8], %s236
          %s238 = smul.u32 %s25, 2
          %s239 = sadd.s32 %s238, %s26
          %s240 = smul.u32 32, %s239
          %s242 = ssub.s32 2048, 2048
          %243 = vsyncadd %s234, %s242
          %s244 = smul.addr %s240, 64
          %s245 = scalar_lea.hbm %s3, %s244
          %s246 = sshll.u32 %s237, 4
          %s247 = int_to_ptr.vmem [resolvable:$true] %s246
          %252 = dma.hbm_to_vmem [thread:$0]  %s245, 2048, %s247, %s234, 64, 64, 4
        $region32: #{tpu_custom_call.1} parent=23 // pred_fallthru
          _
      $region24: #{tpu_custom_call.1} parent=5 // pred_fallthru
        _
      %p253 = scmp.le.s32.totalorder 1, %s18
      %p254 = scmp.lt.s32.totalorder %s18, 3
      %p255 = pnand %p253, %p254
      %p256 = pneg %p255
      // Predicated region
      $region33: #{tpu_custom_call.1} parent=5 // pred_check
        _
      $region34: #{tpu_custom_call.1} parent=5 // pred_check_branch
        %258 = sbr.rel (%p255) target = $region36
      $region35: #{tpu_custom_call.1} parent=5 // pred_region
        %s259 = ssub.s32 %s18, 1
        // Predicated region
        $region37: #{tpu_custom_call.1} parent=35 // pred_check
          %p260 = pneg %p51
        $region38: #{tpu_custom_call.1} parent=35 // pred_check_branch
          %262 = sbr.rel (%p260) target = $region40
        $region39: #{tpu_custom_call.1} parent=35 // pred_region
          %263 = dma.done [#allocation3], 128
        $region40: #{tpu_custom_call.1} parent=35 // pred_fallthru
          _
        %s264 = sand.u32 %s23, 1
        %s265 = scalar_lea.sflag [#allocation6], %s264
        %s266 = sand.u32 %s68, 1
        %s267 = smul.addr %s266, 256
        %s268 = scalar_lea.vmem [#allocation5], %s267
        // Predicated region
        $region41: #{tpu_custom_call.1} parent=35 // pred_check
          %p269 = pneg %p81
        $region42: #{tpu_custom_call.1} parent=35 // pred_check_branch
          %271 = sbr.rel (%p269) target = $region44
        $region43: #{tpu_custom_call.1} parent=35 // pred_region
          %272 = dma.done %s265, 4096
        $region44: #{tpu_custom_call.1} parent=35 // pred_fallthru
          _
        // Predicated region
        $region45: #{tpu_custom_call.1} parent=35 // pred_check
          %p273 = pneg %p107
        $region46: #{tpu_custom_call.1} parent=35 // pred_check_branch
          %275 = sbr.rel (%p273) target = $region48
        $region47: #{tpu_custom_call.1} parent=35 // pred_region
          %276 = dma.done [#allocation6], 128
        $region48: #{tpu_custom_call.1} parent=35 // pred_fallthru
          _
        %s277 = sand.u32 %s124, 1
        %s278 = scalar_lea.sflag [#allocation9], %s277
        %s279 = sand.u32 %s124, 1
        %s280 = smul.addr %s279, 128
        %s281 = scalar_lea.vmem [#allocation8], %s280
        // Predicated region
        $region49: #{tpu_custom_call.1} parent=35 // pred_check
          %p282 = pneg %p137
        $region50: #{tpu_custom_call.1} parent=35 // pred_check_branch
          %284 = sbr.rel (%p282) target = $region52
        $region51: #{tpu_custom_call.1} parent=35 // pred_region
          %285 = dma.done %s278, 2048
        $region52: #{tpu_custom_call.1} parent=35 // pred_fallthru
          _
        %p286 = pneg %p51
        %p287 = pneg %p48
        %s288 = sand.u32 %s23, 1
        %s289 = scalar_lea.sflag [#allocation6], %s288
        %s290 = sand.u32 %s68, 1
        %s291 = smul.addr %s290, 256
        %s292 = scalar_lea.vmem [#allocation5], %s291
        %p293 = pneg %p81
        %p294 = pneg %p78
        %p295 = pneg %p107
        %p296 = pneg %p104
        %s297 = sand.u32 %s124, 1
        %s298 = scalar_lea.sflag [#allocation9], %s297
        %s299 = sand.u32 %s124, 1
        %s300 = smul.addr %s299, 128
        %s301 = scalar_lea.vmem [#allocation8], %s300
        %p302 = pneg %p137
        %p303 = pneg %p134
        %p304 = pneg %p163
        %p305 = pneg %p160
        %s306 = smul.u32 %s27, 2
        %s307 = sadd.s32 %s306, %s28
        %s308 = smul.u32 2, %s307
        %s309 = smul.u32 4, %s27
        %s310 = smul.u32 %s27, 2
        %s311 = sadd.s32 %s310, %s28
        %s312 = smul.u32 32, %s311
        %p314 = scmp.eq.s32.totalorder %s28, 0
        // Predicated region
        $region53: #{tpu_custom_call.1} parent=35 // pred_check
          %p315 = pneg %p314
        $region54: #{tpu_custom_call.1} parent=35 // pred_check_branch
          %317 = sbr.rel (%p315) target = $region56
        $region55: #{tpu_custom_call.1} parent=35 // pred_region
          %318 = vst [vmem:[#allocation10] sm:$0xff] 0.0
        $region56: #{tpu_custom_call.1} parent=35 // pred_fallthru
          _
        %v319 = vld [vmem:[#allocation2] sm:$0xff]
        %v320 = vld [vmem:[%s268] sm:$0xff]
        %v321 = vld [vmem:[%s268 + $0x8] sm:$0xff]
        %v322 = vld [vmem:[%s268 + $0x10] sm:$0xff]
        %v323 = vld [vmem:[%s268 + $0x18] sm:$0xff]
        %v324 = vld [vmem:[%s268 + $0x20] sm:$0xff]
        %v325 = vld [vmem:[%s268 + $0x28] sm:$0xff]
        %v326 = vld [vmem:[%s268 + $0x30] sm:$0xff]
        %v327 = vld [vmem:[%s268 + $0x38] sm:$0xff]
        %v328 = vld [vmem:[%s268 + $0x40] sm:$0xff]
        %v329 = vld [vmem:[%s268 + $0x48] sm:$0xff]
        %v330 = vld [vmem:[%s268 + $0x50] sm:$0xff]
        %v331 = vld [vmem:[%s268 + $0x58] sm:$0xff]
        %v332 = vld [vmem:[%s268 + $0x60] sm:$0xff]
        %v333 = vld [vmem:[%s268 + $0x68] sm:$0xff]
        %v334 = vld [vmem:[%s268 + $0x70] sm:$0xff]
        %v335 = vld [vmem:[%s268 + $0x78] sm:$0xff]
        %v336 = vld [vmem:[%s268 + $0x80] sm:$0xff]
        %v337 = vld [vmem:[%s268 + $0x88] sm:$0xff]
        %v338 = vld [vmem:[%s268 + $0x90] sm:$0xff]
        %v339 = vld [vmem:[%s268 + $0x98] sm:$0xff]
        %v340 = vld [vmem:[%s268 + $0xa0] sm:$0xff]
        %v341 = vld [vmem:[%s268 + $0xa8] sm:$0xff]
        %v342 = vld [vmem:[%s268 + $0xb0] sm:$0xff]
        %v343 = vld [vmem:[%s268 + $0xb8] sm:$0xff]
        %v344 = vld [vmem:[%s268 + $0xc0] sm:$0xff]
        %v345 = vld [vmem:[%s268 + $0xc8] sm:$0xff]
        %v346 = vld [vmem:[%s268 + $0xd0] sm:$0xff]
        %v347 = vld [vmem:[%s268 + $0xd8] sm:$0xff]
        %v348 = vld [vmem:[%s268 + $0xe0] sm:$0xff]
        %v349 = vld [vmem:[%s268 + $0xe8] sm:$0xff]
        %v350 = vld [vmem:[%s268 + $0xf0] sm:$0xff]
        %v351 = vld [vmem:[%s268 + $0xf8] sm:$0xff]
        %v353 = vunpack.c.l.b16 %v319
        %v354 = vunpack.c.h.b16 %v319
        %v355 = vpack.c.b16 %v353, %v353
        %v356 = vpack.c.b16 %v354, %v354
        %v391 = vunpack.c.l.b16 %v320
        %v392 = vunpack.c.h.b16 %v320
        %v393 = vunpack.c.l.b16 %v321
        %v394 = vunpack.c.h.b16 %v321
        %v395 = vunpack.c.l.b16 %v322
        %v396 = vunpack.c.h.b16 %v322
        %v397 = vunpack.c.l.b16 %v323
        %v398 = vunpack.c.h.b16 %v323
        %v399 = vunpack.c.l.b16 %v324
        %v400 = vunpack.c.h.b16 %v324
        %v401 = vunpack.c.l.b16 %v325
        %v402 = vunpack.c.h.b16 %v325
        %v403 = vunpack.c.l.b16 %v326
        %v404 = vunpack.c.h.b16 %v326
        %v405 = vunpack.c.l.b16 %v327
        %v406 = vunpack.c.h.b16 %v327
        %v407 = vunpack.c.l.b16 %v328
        %v408 = vunpack.c.h.b16 %v328
        %v409 = vunpack.c.l.b16 %v329
        %v410 = vunpack.c.h.b16 %v329
        %v411 = vunpack.c.l.b16 %v330
        %v412 = vunpack.c.h.b16 %v330
        %v413 = vunpack.c.l.b16 %v331
        %v414 = vunpack.c.h.b16 %v331
        %v415 = vunpack.c.l.b16 %v332
        %v416 = vunpack.c.h.b16 %v332
        %v417 = vunpack.c.l.b16 %v333
        %v418 = vunpack.c.h.b16 %v333
        %v419 = vunpack.c.l.b16 %v334
        %v420 = vunpack.c.h.b16 %v334
        %v421 = vunpack.c.l.b16 %v335
        %v422 = vunpack.c.h.b16 %v335
        %v423 = vunpack.c.l.b16 %v336
        %v424 = vunpack.c.h.b16 %v336
        %v425 = vunpack.c.l.b16 %v337
        %v426 = vunpack.c.h.b16 %v337
        %v427 = vunpack.c.l.b16 %v338
        %v428 = vunpack.c.h.b16 %v338
        %v429 = vunpack.c.l.b16 %v339
        %v430 = vunpack.c.h.b16 %v339
        %v431 = vunpack.c.l.b16 %v340
        %v432 = vunpack.c.h.b16 %v340
        %v433 = vunpack.c.l.b16 %v341
        %v434 = vunpack.c.h.b16 %v341
        %v435 = vunpack.c.l.b16 %v342
        %v436 = vunpack.c.h.b16 %v342
        %v437 = vunpack.c.l.b16 %v343
        %v438 = vunpack.c.h.b16 %v343
        %v439 = vunpack.c.l.b16 %v344
        %v440 = vunpack.c.h.b16 %v344
        %v441 = vunpack.c.l.b16 %v345
        %v442 = vunpack.c.h.b16 %v345
        %v443 = vunpack.c.l.b16 %v346
        %v444 = vunpack.c.h.b16 %v346
        %v445 = vunpack.c.l.b16 %v347
        %v446 = vunpack.c.h.b16 %v347
        %v447 = vunpack.c.l.b16 %v348
        %v448 = vunpack.c.h.b16 %v348
        %v449 = vunpack.c.l.b16 %v349
        %v450 = vunpack.c.h.b16 %v349
        %v451 = vunpack.c.l.b16 %v350
        %v452 = vunpack.c.h.b16 %v350
        %v453 = vunpack.c.l.b16 %v351
        %v454 = vunpack.c.h.b16 %v351
        %v455 = vpack.c.b16 %v393, %v391
        %v456 = vpack.c.b16 %v394, %v392
        %v457 = vpack.c.b16 %v397, %v395
        %v458 = vpack.c.b16 %v398, %v396
        %v459 = vpack.c.b16 %v401, %v399
        %v460 = vpack.c.b16 %v402, %v400
        %v461 = vpack.c.b16 %v405, %v403
        %v462 = vpack.c.b16 %v406, %v404
        %v463 = vpack.c.b16 %v409, %v407
        %v464 = vpack.c.b16 %v410, %v408
        %v465 = vpack.c.b16 %v413, %v411
        %v466 = vpack.c.b16 %v414, %v412
        %v467 = vpack.c.b16 %v417, %v415
        %v468 = vpack.c.b16 %v418, %v416
        %v469 = vpack.c.b16 %v421, %v419
        %v470 = vpack.c.b16 %v422, %v420
        %v471 = vpack.c.b16 %v425, %v423
        %v472 = vpack.c.b16 %v426, %v424
        %v473 = vpack.c.b16 %v429, %v427
        %v474 = vpack.c.b16 %v430, %v428
        %v475 = vpack.c.b16 %v433, %v431
        %v476 = vpack.c.b16 %v434, %v432
        %v477 = vpack.c.b16 %v437, %v435
        %v478 = vpack.c.b16 %v438, %v436
        %v479 = vpack.c.b16 %v441, %v439
        %v480 = vpack.c.b16 %v442, %v440
        %v481 = vpack.c.b16 %v445, %v443
        %v482 = vpack.c.b16 %v446, %v444
        %v483 = vpack.c.b16 %v449, %v447
        %v484 = vpack.c.b16 %v450, %v448
        %v485 = vpack.c.b16 %v453, %v451
        %v486 = vpack.c.b16 %v454, %v452
        %519 = vmatprep.subr.bf16.mxu0 %v456
        %520 = vmatpush1.bf16.msra.mxu0 %v455
        %521 = vmatprep.subr.bf16.mxu0 %v458
        %522 = vmatpush1.bf16.msra.mxu0 %v457
        %523 = vmatprep.subr.bf16.mxu0 %v460
        %524 = vmatpush1.bf16.msra.mxu0 %v459
        %525 = vmatprep.subr.bf16.mxu0 %v462
        %526 = vmatpush1.bf16.msra.mxu0 %v461
        %527 = vmatprep.subr.bf16.mxu0 %v464
        %528 = vmatpush1.bf16.msra.mxu0 %v463
        %529 = vmatprep.subr.bf16.mxu0 %v466
        %530 = vmatpush1.bf16.msra.mxu0 %v465
        %531 = vmatprep.subr.bf16.mxu0 %v468
        %532 = vmatpush1.bf16.msra.mxu0 %v467
        %533 = vmatprep.subr.bf16.mxu0 %v470
        %534 = vmatpush1.bf16.msra.mxu0 %v469
        %535 = vmatprep.subr.bf16.mxu0 %v472
        %536 = vmatpush1.bf16.msra.mxu0 %v471
        %537 = vmatprep.subr.bf16.mxu0 %v474
        %538 = vmatpush1.bf16.msra.mxu0 %v473
        %539 = vmatprep.subr.bf16.mxu0 %v476
        %540 = vmatpush1.bf16.msra.mxu0 %v475
        %541 = vmatprep.subr.bf16.mxu0 %v478
        %542 = vmatpush1.bf16.msra.mxu0 %v477
        %543 = vmatprep.subr.bf16.mxu0 %v480
        %544 = vmatpush1.bf16.msra.mxu0 %v479
        %545 = vmatprep.subr.bf16.mxu0 %v482
        %546 = vmatpush1.bf16.msra.mxu0 %v481
        %547 = vmatprep.subr.bf16.mxu0 %v484
        %548 = vmatpush1.bf16.msra.mxu0 %v483
        %549 = vmatprep.subr.bf16.mxu0 %v486
        %550 = vmatpush1.bf16.msra.mxu0 %v485
        %551 = vmatprep.mubr.bf16.mxu0 %v356
        %552 = vmatmul.mubr.bf16.gmra.mrb[0].mxu0 %v355
        %v553 = vpop.f32.mrb[0].mxu0
        %v554 = vadd.f32 0.0, %v553
        %v555 = vpop.f32.mrb[0].mxu0
        %v556 = vadd.f32 0.0, %v555
        %v557 = vpop.f32.mrb[0].mxu0
        %v558 = vpop.f32.mrb[0].mxu0
        %559 = vdwg.mxu0
        %v560 = vrot.slane %v554, 4
        %v561 = vadd.f32 %v554, %v560
        %v562 = vrot.slane %v561, 2
        %v563 = vadd.f32 %v561, %v562
        %v564 = vrot.slane %v563, 1
        %v565 = vadd.f32 %v563, %v564
        %v566 = vrot.slane %v556, 4
        %v567 = vadd.f32 %v556, %v566
        %v568 = vrot.slane %v567, 2
        %v569 = vadd.f32 %v567, %v568
        %v570 = vrot.slane %v569, 1
        %v571 = vadd.f32 %v569, %v570
        %v572 = vrcp.pop 8.0
        %v573 = vmul.f32 %v565, %v572
        %v574 = vmul.f32 %v571, %v572
        %v575 = vsub.f32 %v554, %v573
        %v576 = vsub.f32 %v556, %v574
        %v577 = vmul.f32 %v575, %v575
        %v578 = vmul.f32 %v576, %v576
        %v579 = vrot.slane %v577, 4
        %v580 = vadd.f32 %v577, %v579
        %v581 = vrot.slane %v580, 2
        %v582 = vadd.f32 %v580, %v581
        %v583 = vrot.slane %v582, 1
        %v584 = vadd.f32 %v582, %v583
        %v585 = vrot.slane %v578, 4
        %v586 = vadd.f32 %v578, %v585
        %v587 = vrot.slane %v586, 2
        %v588 = vadd.f32 %v586, %v587
        %v589 = vrot.slane %v588, 1
        %v590 = vadd.f32 %v588, %v589
        %v591 = vmul.f32 %v584, %v572
        %v592 = vmul.f32 %v590, %v572
        %s593 = smul.u32 %s28, 256
        %s594 = sshra.s32 %s593, 7
        %s595 = sand.u32 %s593, 127
        %s596 = smul.addr %s594, 2
        %s597 = scalar_lea.vmem [#allocation7], %s596
        %v598 = vld [vmem:[%s597] ss:$2 sm:$0x3]
        %s599 = scalar_lea.vmem %s597, 1 [#allocation7]
        %v600 = vld [vmem:[%s599] ss:$2 sm:$0x3]
        %v601 = vadd.f32 %v591, 1e-05
        %v602 = vadd.f32 %v592, 1e-05
        %v603 = vrsqrt.pop %v601
        %v604 = vrsqrt.pop %v602
        %v605 = vmul.f32 %v575, %v603
        %v606 = vmul.f32 %v576, %v604
        %v608 = vlaneseq
        %v609 = vshrl.u32 %v608, 7
        %v610 = vsub.s32 0, %v609
        %v611 = vrot.slane %v598, %v610
        %v612 = vlaneseq
        %v613 = vshrl.u32 %v612, 7
        %v614 = vsub.s32 1, %v613
        %v615 = vrot.slane %v598, %v614
        %v618 = vmul.f32 %v605, %v611
        %v619 = vmul.f32 %v606, %v615
        %v621 = vlaneseq
        %v622 = vshrl.u32 %v621, 7
        %v623 = vsub.s32 0, %v622
        %v624 = vrot.slane %v600, %v623
        %v625 = vlaneseq
        %v626 = vshrl.u32 %v625, 7
        %v627 = vsub.s32 1, %v626
        %v628 = vrot.slane %v600, %v627
        %v631 = vadd.f32 %v618, %v624
        %v632 = vadd.f32 %v619, %v628
        %v633 = vmax.f32 %v631, 0.0
        %v634 = vmax.f32 %v632, 0.0
        %v635 = vpack.c.bf16 %v633, %v633
        %v636 = vpack.c.bf16 %v634, %v634
        %v637 = vld [vmem:[#allocation10] sm:$0xff]
        %v638 = vld [vmem:[%s281] sm:$0xf]
        %v639 = vld [vmem:[%s281 + $0x4] sm:$0xf]
        %v640 = vld [vmem:[%s281 + $0x8] sm:$0xf]
        %v641 = vld [vmem:[%s281 + $0xc] sm:$0xf]
        %v642 = vld [vmem:[%s281 + $0x10] sm:$0xf]
        %v643 = vld [vmem:[%s281 + $0x14] sm:$0xf]
        %v644 = vld [vmem:[%s281 + $0x18] sm:$0xf]
        %v645 = vld [vmem:[%s281 + $0x1c] sm:$0xf]
        %v646 = vld [vmem:[%s281 + $0x20] sm:$0xf]
        %v647 = vld [vmem:[%s281 + $0x24] sm:$0xf]
        %v648 = vld [vmem:[%s281 + $0x28] sm:$0xf]
        %v649 = vld [vmem:[%s281 + $0x2c] sm:$0xf]
        %v650 = vld [vmem:[%s281 + $0x30] sm:$0xf]
        %v651 = vld [vmem:[%s281 + $0x34] sm:$0xf]
        %v652 = vld [vmem:[%s281 + $0x38] sm:$0xf]
        %v653 = vld [vmem:[%s281 + $0x3c] sm:$0xf]
        %v654 = vld [vmem:[%s281 + $0x40] sm:$0xf]
        %v655 = vld [vmem:[%s281 + $0x44] sm:$0xf]
        %v656 = vld [vmem:[%s281 + $0x48] sm:$0xf]
        %v657 = vld [vmem:[%s281 + $0x4c] sm:$0xf]
        %v658 = vld [vmem:[%s281 + $0x50] sm:$0xf]
        %v659 = vld [vmem:[%s281 + $0x54] sm:$0xf]
        %v660 = vld [vmem:[%s281 + $0x58] sm:$0xf]
        %v661 = vld [vmem:[%s281 + $0x5c] sm:$0xf]
        %v662 = vld [vmem:[%s281 + $0x60] sm:$0xf]
        %v663 = vld [vmem:[%s281 + $0x64] sm:$0xf]
        %v664 = vld [vmem:[%s281 + $0x68] sm:$0xf]
        %v665 = vld [vmem:[%s281 + $0x6c] sm:$0xf]
        %v666 = vld [vmem:[%s281 + $0x70] sm:$0xf]
        %v667 = vld [vmem:[%s281 + $0x74] sm:$0xf]
        %v668 = vld [vmem:[%s281 + $0x78] sm:$0xf]
        %v669 = vld [vmem:[%s281 + $0x7c] sm:$0xf]
        %v702 = vunpack.c.l.b16 %v638
        %v703 = vunpack.c.l.b16 %v639
        %v704 = vunpack.c.l.b16 %v640
        %v705 = vunpack.c.l.b16 %v641
        %v706 = vunpack.c.l.b16 %v642
        %v707 = vunpack.c.l.b16 %v643
        %v708 = vunpack.c.l.b16 %v644
        %v709 = vunpack.c.l.b16 %v645
        %v710 = vunpack.c.l.b16 %v646
        %v711 = vunpack.c.l.b16 %v647
        %v712 = vunpack.c.l.b16 %v648
        %v713 = vunpack.c.l.b16 %v649
        %v714 = vunpack.c.l.b16 %v650
        %v715 = vunpack.c.l.b16 %v651
        %v716 = vunpack.c.l.b16 %v652
        %v717 = vunpack.c.l.b16 %v653
        %v718 = vunpack.c.l.b16 %v654
        %v719 = vunpack.c.l.b16 %v655
        %v720 = vunpack.c.l.b16 %v656
        %v721 = vunpack.c.l.b16 %v657
        %v722 = vunpack.c.l.b16 %v658
        %v723 = vunpack.c.l.b16 %v659
        %v724 = vunpack.c.l.b16 %v660
        %v725 = vunpack.c.l.b16 %v661
        %v726 = vunpack.c.l.b16 %v662
        %v727 = vunpack.c.l.b16 %v663
        %v728 = vunpack.c.l.b16 %v664
        %v729 = vunpack.c.l.b16 %v665
        %v730 = vunpack.c.l.b16 %v666
        %v731 = vunpack.c.l.b16 %v667
        %v732 = vunpack.c.l.b16 %v668
        %v733 = vunpack.c.l.b16 %v669
        %v734 = vpack.c.b16 %v703, %v702
        %v735 = vpack.c.b16 %v705, %v704
        %v736 = vpack.c.b16 %v707, %v706
        %v737 = vpack.c.b16 %v709, %v708
        %v738 = vpack.c.b16 %v711, %v710
        %v739 = vpack.c.b16 %v713, %v712
        %v740 = vpack.c.b16 %v715, %v714
        %v741 = vpack.c.b16 %v717, %v716
        %v742 = vpack.c.b16 %v719, %v718
        %v743 = vpack.c.b16 %v721, %v720
        %v744 = vpack.c.b16 %v723, %v722
        %v745 = vpack.c.b16 %v725, %v724
        %v746 = vpack.c.b16 %v727, %v726
        %v747 = vpack.c.b16 %v729, %v728
        %v748 = vpack.c.b16 %v731, %v730
        %v749 = vpack.c.b16 %v733, %v732
        %766 = vmatprep.subr.bf16.mxu0 0
        %767 = vmatpush1.bf16.msra.mxu0 %v734
        %768 = vmatprep.subr.bf16.mxu0 0
        %769 = vmatpush1.bf16.msra.mxu0 %v735
        %770 = vmatprep.subr.bf16.mxu0 0
        %771 = vmatpush1.bf16.msra.mxu0 %v736
        %772 = vmatprep.subr.bf16.mxu0 0
        %773 = vmatpush1.bf16.msra.mxu0 %v737
        %774 = vmatprep.subr.bf16.mxu0 0
        %775 = vmatpush1.bf16.msra.mxu0 %v738
        %776 = vmatprep.subr.bf16.mxu0 0
        %777 = vmatpush1.bf16.msra.mxu0 %v739
        %778 = vmatprep.subr.bf16.mxu0 0
        %779 = vmatpush1.bf16.msra.mxu0 %v740
        %780 = vmatprep.subr.bf16.mxu0 0
        %781 = vmatpush1.bf16.msra.mxu0 %v741
        %782 = vmatprep.subr.bf16.mxu0 0
        %783 = vmatpush1.bf16.msra.mxu0 %v742
        %784 = vmatprep.subr.bf16.mxu0 0
        %785 = vmatpush1.bf16.msra.mxu0 %v743
        %786 = vmatprep.subr.bf16.mxu0 0
        %787 = vmatpush1.bf16.msra.mxu0 %v744
        %788 = vmatprep.subr.bf16.mxu0 0
        %789 = vmatpush1.bf16.msra.mxu0 %v745
        %790 = vmatprep.subr.bf16.mxu0 0
        %791 = vmatpush1.bf16.msra.mxu0 %v746
        %792 = vmatprep.subr.bf16.mxu0 0
        %793 = vmatpush1.bf16.msra.mxu0 %v747
        %794 = vmatprep.subr.bf16.mxu0 0
        %795 = vmatpush1.bf16.msra.mxu0 %v748
        %796 = vmatprep.subr.bf16.mxu0 0
        %797 = vmatpush1.bf16.msra.mxu0 %v749
        %798 = vmatprep.mubr.bf16.mxu0 %v636
        %799 = vmatmul.mubr.bf16.gmra.mrb[0].mxu0 %v635
        %v800 = vpop.f32.mrb[0].mxu0
        %v801 = vadd.f32 0.0, %v800
        %v802 = vpop.f32.mrb[0].mxu0
        %v803 = vpop.f32.mrb[0].mxu0
        %v804 = vpop.f32.mrb[0].mxu0
        %805 = vdwg.mxu0
        %v806 = vadd.f32 %v637, %v801
        %807 = vst [vmem:[#allocation10] sm:$0xff] %v806
        // Predicated region
        $region57: #{tpu_custom_call.1} parent=35 // pred_check
          %p808 = pneg %p160
        $region58: #{tpu_custom_call.1} parent=35 // pred_check_branch
          %810 = sbr.rel (%p808) target = $region60
        $region59: #{tpu_custom_call.1} parent=35 // pred_region
          %s812 = ssub.s32 128, 128
          %813 = vsyncadd [#allocation4], %s812
          %s814 = smul.addr %s27, 128
          %s815 = scalar_lea.hbm %s4, %s814
          %s817 = sshll.u32 [#allocation10], 4
          %s818 = int_to_ptr.vmem [resolvable:$true] %s817
          %820 = dma.vmem_to_hbm [thread:$0]  %s818, 128, %s815, [#allocation4]
        $region60: #{tpu_custom_call.1} parent=35 // pred_fallthru
          _
        // Predicated region
        $region61: #{tpu_custom_call.1} parent=35 // pred_check
          %p821 = pneg %p160
        $region62: #{tpu_custom_call.1} parent=35 // pred_check_branch
          %823 = sbr.rel (%p821) target = $region64
        $region63: #{tpu_custom_call.1} parent=35 // pred_region
          %824 = dma.done [#allocation4], 128
        $region64: #{tpu_custom_call.1} parent=35 // pred_fallthru
          _
      $region36: #{tpu_custom_call.1} parent=5 // pred_fallthru
        _
      %p825 = scmp.le.s32.totalorder 2, %s18
      // Predicated region
      $region65: #{tpu_custom_call.1} parent=5 // pred_check
        %p826 = pneg %p825
      $region66: #{tpu_custom_call.1} parent=5 // pred_check_branch
        %828 = sbr.rel (%p826) target = $region68
      $region67: #{tpu_custom_call.1} parent=5 // pred_region
        %s829 = ssub.s32 %s18, 2
      $region68: #{tpu_custom_call.1} parent=5 // pred_fallthru
        _
    $region6: #{tpu_custom_call.1} parent=1 // loop_footer
      %s22 = sadd.s32 1, %s18
    $region7: #{tpu_custom_call.1} parent=1 // loop_footer_branch
      %17 = sbr.rel target = $region3
    $region8: #{tpu_custom_call.1} parent=1 // loop_exit
      _
    %830 = vsyncpa [#allocation3], 1
    %s831 = scalar_lea.sflag [#allocation3], 1
    %832 = vsyncpa %s831, 1
    %833 = vsyncpa [#allocation6], 1
    %s834 = scalar_lea.sflag [#allocation6], 1
    %835 = vsyncpa %s834, 1
    %836 = vsyncpa [#allocation9], 1
    %s837 = scalar_lea.sflag [#allocation9], 1
    %838 = vsyncpa %s837, 1
    %839 = vsyncpa [#allocation4], 1
    %s840 = scalar_lea.sflag [#allocation4], 1
    %841 = vsyncpa %s840, 1

</llo_original>
